<compile_context>
chip_gen: v5e
topology: v5e:2x2
jax: 0.10.0
libtpu: 0.0.40
codegen_flags: <defaults>
</compile_context>

<pallas_src>
import functools

import jax
import jax.numpy as jnp
from jax.experimental import pallas as pl
from jax.experimental.pallas import tpu as pltpu

_LANE = 128     # lane width: feature-dim padding target
_EPS = 1e-5     # PyTorch nn.LayerNorm default eps


def _round_up(n, m):
    return ((n + m - 1) // m) * m


def _mlp_kernel(x_ref, w1_ref, b1_ref, g_ref, be_ref, w2_ref, b2_ref, o_ref,
                *, hidden_real):
    # fc1 on the MXU: bf16 operands, f32 accumulate.
    x = x_ref[...].astype(jnp.bfloat16)                          # (TB, D_in_p)
    h = jnp.dot(x, w1_ref[...], preferred_element_type=jnp.float32)
    h = h + b1_ref[...]                                          # padded hidden cols stay exact 0

    # LayerNorm over the *real* hidden width. Padded hidden columns of h are
    # exact zeros (zero-padded w1 columns and b1), so the sums only see real
    # data; no iota/where mask needed.
    inv_h = 1.0 / float(hidden_real)
    mean = jnp.sum(h, axis=-1, keepdims=True) * inv_h
    # E[h^2] - mean^2; clamp at 0 to guard the mild cancellation risk.
    var = jnp.maximum(
        jnp.sum(h * h, axis=-1, keepdims=True) * inv_h - mean * mean, 0.0)
    h = (h - mean) * jax.lax.rsqrt(var + _EPS)
    h = h * g_ref[...] + be_ref[...]                             # padded gamma/beta = 0 -> padded cols -> 0

    # ReLU
    h = jnp.maximum(h, 0.0)

    # TODO(synk): Dropout(0.5) is eval-mode identity here; training mode would
    #             use pltpu.prng_seed + pltpu.prng_random_bits with 1/(1-p) scaling.

    # fc2 on the MXU (padded hidden rows of w2 are zero, contribute nothing).
    y = jnp.dot(h.astype(jnp.bfloat16), w2_ref[...],
                preferred_element_type=jnp.float32)
    y = y + b2_ref[...]

    # Sigmoid via a single EUP push: sigmoid(y) = 0.5 * (tanh(y/2) + 1).
    o_ref[...] = (0.5 * (jnp.tanh(0.5 * y) + 1.0)).astype(o_ref.dtype)


def mlp_forward(x, w1, b1, gamma, beta, w2, b2, *, tile_b=None):
    """x: (B, D_in); w1: (D_in, H); b1/gamma/beta: (1, H); w2: (H, D_out); b2: (1, D_out)."""
    B, d_in = x.shape
    hidden = w1.shape[1]
    d_out = w2.shape[1]

    # Lane-pad feature dims only (no batch padding).
    d_in_p = _round_up(d_in, _LANE)
    h_p = _round_up(hidden, _LANE)
    d_out_p = _round_up(d_out, _LANE)

    # Batch tile: >=128 fills the MXU rows; cap at 256 and keep grid >= 2 steps
    # so the parallel batch axis can still split across v7x's 2 TensorCores.
    if tile_b is None:
        tile_b = min(256, max(8, _round_up(pl.cdiv(B, 2), 8)))
    tile_b = max(8, _round_up(tile_b, 8))
    grid = (pl.cdiv(B, tile_b),)

    pad2 = lambda a, r, c: jnp.pad(a, ((0, r - a.shape[0]), (0, c - a.shape[1])))
    xp = pad2(x, B, d_in_p)                                    # feature pad only
    w1p = pad2(w1, d_in_p, h_p).astype(jnp.bfloat16)
    b1p = pad2(b1, 1, h_p)
    gp = pad2(gamma, 1, h_p)                                   # padded gamma = 0 -> padded LN output = 0
    bep = pad2(beta, 1, h_p)
    w2p = pad2(w2, h_p, d_out_p).astype(jnp.bfloat16)
    b2p = pad2(b2, 1, d_out_p)

    # Generation-aware VMEM budget (~20% headroom for compiler scratch).
    try:
        vmem_cap = int(pltpu.get_tpu_info().vmem_capacity_bytes)
    except Exception:
        vmem_cap = 64 * 1024 * 1024
    vmem_limit = int(0.8 * vmem_cap)

    # Size-gate the fully-resident weight scheme (bf16 weights).
    weight_bytes = 2 * (d_in_p * h_p + h_p * d_out_p)
    if weight_bytes > int(0.6 * vmem_cap):
        # TODO(synk): add a K-tiled "arbitrary" grid axis with an f32 VMEM
        #             accumulator instead of fully-resident weights.
        raise NotImplementedError("weights exceed the fully-resident VMEM budget")

    # Weights/biases: constant block index + single buffer -> one VMEM copy,
    # fetched once, resident across all batch tiles.
    resident = lambda shape: pl.BlockSpec(shape, lambda i: (0, 0),
                                          pipeline_mode=pl.Buffered(1))

    flops = 2 * B * (d_in_p * h_p + h_p * d_out_p)
    bytes_accessed = (4 * xp.size                      # f32 activations in
                      + 2 * (w1p.size + w2p.size)      # bf16 weights
                      + 4 * (b1p.size + gp.size + bep.size + b2p.size)
                      + 4 * B * d_out_p)               # f32 output

    out_p = pl.pallas_call(
        functools.partial(_mlp_kernel, hidden_real=hidden),
        out_shape=jax.ShapeDtypeStruct((B, d_out_p), jnp.float32),
        grid=grid,
        in_specs=[
            pl.BlockSpec((tile_b, d_in_p), lambda i: (i, 0)),   # x streams per batch tile
            resident((d_in_p, h_p)),                            # w1 (bf16)
            resident((1, h_p)),                                 # b1
            resident((1, h_p)),                                 # gamma
            resident((1, h_p)),                                 # beta
            resident((h_p, d_out_p)),                           # w2 (bf16)
            resident((1, d_out_p)),                             # b2
        ],
        out_specs=pl.BlockSpec((tile_b, d_out_p), lambda i: (i, 0)),
        compiler_params=pltpu.CompilerParams(
            dimension_semantics=("parallel",),
            vmem_limit_bytes=vmem_limit,
        ),
        cost_estimate=pl.CostEstimate(
            flops=flops,
            transcendentals=B * d_out_p,   # one tanh per output element
            bytes_accessed=bytes_accessed,
        ),
    )(xp, w1p, b1p, gp, bep, w2p, b2p)

    # Strip lane padding of the output features (batch was never padded).
    return out_p if d_out == d_out_p else out_p[:, :d_out]


def init_params(key, input_size, hidden_size, output_size):
    """Deterministic init mimicking nn.Linear defaults (uniform +/- 1/sqrt(fan_in))."""
    k1, k2, k3, k4 = jax.random.split(key, 4)
    lim1 = 1.0 / jnp.sqrt(jnp.float32(input_size))
    lim2 = 1.0 / jnp.sqrt(jnp.float32(hidden_size))
    # Stored transposed: (in_features, out_features) so the kernel does x @ W.
    w1 = jax.random.uniform(k1, (input_size, hidden_size), jnp.float32, -lim1, lim1)
    b1 = jax.random.uniform(k2, (1, hidden_size), jnp.float32, -lim1, lim1)
    w2 = jax.random.uniform(k3, (hidden_size, output_size), jnp.float32, -lim2, lim2)
    b2 = jax.random.uniform(k4, (1, output_size), jnp.float32, -lim2, lim2)
    gamma = jnp.ones((1, hidden_size), jnp.float32)   # LayerNorm weight
    beta = jnp.zeros((1, hidden_size), jnp.float32)   # LayerNorm bias
    return w1, b1, gamma, beta, w2, b2


if __name__ == "__main__":
    batch, input_size, hidden_size, output_size = 16, 16, 32, 4

    key = jax.random.PRNGKey(0)
    kx, kp = jax.random.split(key)
    x = jax.random.normal(kx, (batch, input_size), jnp.float32)
    w1, b1, gamma, beta, w2, b2 = init_params(kp, input_size, hidden_size, output_size)

    out = mlp_forward(x, w1, b1, gamma, beta, w2, b2)
    out = jax.block_until_ready(out)

    # Reference in plain JAX f32 (same math, eval-mode dropout).
    hr = x @ w1 + b1
    mean = hr.mean(-1, keepdims=True)
    var = ((hr - mean) ** 2).mean(-1, keepdims=True)
    hr = (hr - mean) / jnp.sqrt(var + _EPS) * gamma + beta
    hr = jnp.maximum(hr, 0.0)
    ref = jax.nn.sigmoid(hr @ w2 + b2)

    assert out.shape == (batch, output_size)
    # Tolerance accounts for bf16 matmul operands (f32 accumulate, f32 epilogue).
    assert jnp.allclose(out, ref, atol=3e-2, rtol=3e-2), "mismatch vs reference"

    print("KERNEL_OK")
</pallas_src>

<mosaic_0001>
module attributes {stable_mosaic.version = 11 : i64} {
  func.func @_mlp_kernel(%arg0: i32, %arg1: memref<8x128xf32, #tpu.memory_space<vmem>>, %arg2: memref<128x128xbf16, #tpu.memory_space<vmem>>, %arg3: memref<1x128xf32, #tpu.memory_space<vmem>>, %arg4: memref<1x128xf32, #tpu.memory_space<vmem>>, %arg5: memref<1x128xf32, #tpu.memory_space<vmem>>, %arg6: memref<128x128xbf16, #tpu.memory_space<vmem>>, %arg7: memref<1x128xf32, #tpu.memory_space<vmem>>, %arg8: memref<8x128xf32, #tpu.memory_space<vmem>>) attributes {dimension_semantics = [#tpu.dimension_semantics<parallel>], iteration_bounds = array<i64: 2>, scalar_prefetch = 0 : i64, scratch_operands = 0 : i64, tpu.core_type = #tpu.core_type<tc>, window_params = [{transform_indices = @transform_0, window_bounds = array<i64: 8, 128>}, {pipeline_mode = #tpu.pipeline_mode<synchronous>, transform_indices = @transform_1, window_bounds = array<i64: 128, 128>}, {pipeline_mode = #tpu.pipeline_mode<synchronous>, transform_indices = @transform_2, window_bounds = array<i64: 1, 128>}, {pipeline_mode = #tpu.pipeline_mode<synchronous>, transform_indices = @transform_3, window_bounds = array<i64: 1, 128>}, {pipeline_mode = #tpu.pipeline_mode<synchronous>, transform_indices = @transform_4, window_bounds = array<i64: 1, 128>}, {pipeline_mode = #tpu.pipeline_mode<synchronous>, transform_indices = @transform_5, window_bounds = array<i64: 128, 128>}, {pipeline_mode = #tpu.pipeline_mode<synchronous>, transform_indices = @transform_6, window_bounds = array<i64: 1, 128>}, {transform_indices = @transform_7, window_bounds = array<i64: 8, 128>}]} {
    %c0 = arith.constant 0 : index
    %c0_0 = arith.constant 0 : index
    %0 = vector.load %arg1[%c0, %c0_0] : memref<8x128xf32, #tpu.memory_space<vmem>>, vector<8x128xf32>
    %1 = arith.truncf %0 : vector<8x128xf32> to vector<8x128xbf16>
    %c0_1 = arith.constant 0 : index
    %c0_2 = arith.constant 0 : index
    %2 = vector.load %arg2[%c0_1, %c0_2] : memref<128x128xbf16, #tpu.memory_space<vmem>>, vector<128x128xbf16>
    %cst = arith.constant dense<0.000000e+00> : vector<8x128xf32>
    %3 = tpu.matmul %1, %2, %cst {dimension_numbers = #tpu.dot_dimension_numbers<[1], [0], [0], [1], [0, 0, 1, 1], [], []>} : vector<8x128xbf16>, vector<128x128xbf16>, vector<8x128xf32> -> vector<8x128xf32>
    %c0_3 = arith.constant 0 : index
    %c0_4 = arith.constant 0 : index
    %4 = vector.load %arg3[%c0_3, %c0_4] : memref<1x128xf32, #tpu.memory_space<vmem>>, vector<1x128xf32>
    %5 = vector.broadcast %4 : vector<1x128xf32> to vector<8x128xf32>
    %6 = arith.addf %3, %5 : vector<8x128xf32>
    %cst_5 = arith.constant dense<0.000000e+00> : vector<8xf32>
    %7 = vector.multi_reduction <add>, %6, %cst_5 [1] : vector<8x128xf32> to vector<8xf32>
    %8 = vector.shape_cast %7 : vector<8xf32> to vector<8x1xf32>
    %cst_6 = arith.constant 3.125000e-02 : f32
    %9 = vector.broadcast %cst_6 : f32 to vector<8x1xf32>
    %10 = arith.mulf %8, %9 : vector<8x1xf32>
    %11 = arith.mulf %6, %6 : vector<8x128xf32>
    %cst_7 = arith.constant dense<0.000000e+00> : vector<8xf32>
    %12 = vector.multi_reduction <add>, %11, %cst_7 [1] : vector<8x128xf32> to vector<8xf32>
    %13 = vector.shape_cast %12 : vector<8xf32> to vector<8x1xf32>
    %cst_8 = arith.constant 3.125000e-02 : f32
    %14 = vector.broadcast %cst_8 : f32 to vector<8x1xf32>
    %15 = arith.mulf %13, %14 : vector<8x1xf32>
    %16 = arith.mulf %10, %10 : vector<8x1xf32>
    %17 = arith.subf %15, %16 : vector<8x1xf32>
    %cst_9 = arith.constant 0.000000e+00 : f32
    %18 = vector.broadcast %cst_9 : f32 to vector<8x1xf32>
    %19 = arith.maximumf %17, %18 : vector<8x1xf32>
    %20 = vector.broadcast %10 : vector<8x1xf32> to vector<8x128xf32>
    %21 = arith.subf %6, %20 : vector<8x128xf32>
    %cst_10 = arith.constant 9.99999974E-6 : f32
    %22 = vector.broadcast %cst_10 : f32 to vector<8x1xf32>
    %23 = arith.addf %19, %22 : vector<8x1xf32>
    %24 = math.rsqrt %23 : vector<8x1xf32>
    %25 = vector.broadcast %24 : vector<8x1xf32> to vector<8x128xf32>
    %26 = arith.mulf %21, %25 : vector<8x128xf32>
    %c0_11 = arith.constant 0 : index
    %c0_12 = arith.constant 0 : index
    %27 = vector.load %arg4[%c0_11, %c0_12] : memref<1x128xf32, #tpu.memory_space<vmem>>, vector<1x128xf32>
    %28 = vector.broadcast %27 : vector<1x128xf32> to vector<8x128xf32>
    %29 = arith.mulf %26, %28 : vector<8x128xf32>
    %c0_13 = arith.constant 0 : index
    %c0_14 = arith.constant 0 : index
    %30 = vector.load %arg5[%c0_13, %c0_14] : memref<1x128xf32, #tpu.memory_space<vmem>>, vector<1x128xf32>
    %31 = vector.broadcast %30 : vector<1x128xf32> to vector<8x128xf32>
    %32 = arith.addf %29, %31 : vector<8x128xf32>
    %cst_15 = arith.constant 0.000000e+00 : f32
    %33 = vector.broadcast %cst_15 : f32 to vector<8x128xf32>
    %34 = arith.maximumf %32, %33 : vector<8x128xf32>
    %35 = arith.truncf %34 : vector<8x128xf32> to vector<8x128xbf16>
    %c0_16 = arith.constant 0 : index
    %c0_17 = arith.constant 0 : index
    %36 = vector.load %arg6[%c0_16, %c0_17] : memref<128x128xbf16, #tpu.memory_space<vmem>>, vector<128x128xbf16>
    %cst_18 = arith.constant dense<0.000000e+00> : vector<8x128xf32>
    %37 = tpu.matmul %35, %36, %cst_18 {dimension_numbers = #tpu.dot_dimension_numbers<[1], [0], [0], [1], [0, 0, 1, 1], [], []>} : vector<8x128xbf16>, vector<128x128xbf16>, vector<8x128xf32> -> vector<8x128xf32>
    %c0_19 = arith.constant 0 : index
    %c0_20 = arith.constant 0 : index
    %38 = vector.load %arg7[%c0_19, %c0_20] : memref<1x128xf32, #tpu.memory_space<vmem>>, vector<1x128xf32>
    %39 = vector.broadcast %38 : vector<1x128xf32> to vector<8x128xf32>
    %40 = arith.addf %37, %39 : vector<8x128xf32>
    %cst_21 = arith.constant 5.000000e-01 : f32
    %41 = vector.broadcast %cst_21 : f32 to vector<8x128xf32>
    %42 = arith.mulf %41, %40 : vector<8x128xf32>
    %43 = math.tanh %42 : vector<8x128xf32>
    %cst_22 = arith.constant 1.000000e+00 : f32
    %44 = vector.broadcast %cst_22 : f32 to vector<8x128xf32>
    %45 = arith.addf %43, %44 : vector<8x128xf32>
    %cst_23 = arith.constant 5.000000e-01 : f32
    %46 = vector.broadcast %cst_23 : f32 to vector<8x128xf32>
    %47 = arith.mulf %46, %45 : vector<8x128xf32>
    %c0_24 = arith.constant 0 : index
    %c0_25 = arith.constant 0 : index
    %48 = vector.load %arg8[%c0_24, %c0_25] : memref<8x128xf32, #tpu.memory_space<vmem>>, vector<8x128xf32>
    tpu.vector_store %arg8[%c0_24, %c0_25], %47 {strides = array<i32>} : memref<8x128xf32, #tpu.memory_space<vmem>>, vector<8x128xf32>,
    return
  }
  func.func @transform_0(%arg0: i32) -> (i32, i32) {
    %c0_i32 = arith.constant 0 : i32
    %c0_i32_0 = arith.constant 0 : i32
    return %arg0, %c0_i32 : i32, i32
  }
  func.func @transform_1(%arg0: i32) -> (i32, i32) {
    %c0_i32 = arith.constant 0 : i32
    %c0_i32_0 = arith.constant 0 : i32
    %c0_i32_1 = arith.constant 0 : i32
    return %c0_i32, %c0_i32_0 : i32, i32
  }
  func.func @transform_2(%arg0: i32) -> (i32, i32) {
    %c0_i32 = arith.constant 0 : i32
    %c0_i32_0 = arith.constant 0 : i32
    %c0_i32_1 = arith.constant 0 : i32
    return %c0_i32, %c0_i32_0 : i32, i32
  }
  func.func @transform_3(%arg0: i32) -> (i32, i32) {
    %c0_i32 = arith.constant 0 : i32
    %c0_i32_0 = arith.constant 0 : i32
    %c0_i32_1 = arith.constant 0 : i32
    return %c0_i32, %c0_i32_0 : i32, i32
  }
  func.func @transform_4(%arg0: i32) -> (i32, i32) {
    %c0_i32 = arith.constant 0 : i32
    %c0_i32_0 = arith.constant 0 : i32
    %c0_i32_1 = arith.constant 0 : i32
    return %c0_i32, %c0_i32_0 : i32, i32
  }
  func.func @transform_5(%arg0: i32) -> (i32, i32) {
    %c0_i32 = arith.constant 0 : i32
    %c0_i32_0 = arith.constant 0 : i32
    %c0_i32_1 = arith.constant 0 : i32
    return %c0_i32, %c0_i32_0 : i32, i32
  }
  func.func @transform_6(%arg0: i32) -> (i32, i32) {
    %c0_i32 = arith.constant 0 : i32
    %c0_i32_0 = arith.constant 0 : i32
    %c0_i32_1 = arith.constant 0 : i32
    return %c0_i32, %c0_i32_0 : i32, i32
  }
  func.func @transform_7(%arg0: i32) -> (i32, i32) {
    %c0_i32 = arith.constant 0 : i32
    %c0_i32_0 = arith.constant 0 : i32
    return %arg0, %c0_i32 : i32, i32
  }
}

</mosaic_0001>

<llo_original>
// kernel: tpu_custom_call.1
$region0: #{tpu_custom_call.1}
  #allocation0 [shape = 'u32[]', space=smem, size = 0x4, offset = 0x4, fixed_abs, tag = 'smem constant byte address 0x4 - core index']
  #allocation1 [shape = 'u32[72,128]{1,0:T(1,128)}', space=vmem, size = 0x9000, scoped, tag = 'internal scratch']
  %s0 = inlined_call_operand.hbm [shape: f32[16,128], index: 0, kind: input, shape index: {}]
  %s1 = inlined_call_operand.hbm [shape: bf16[128,128], index: 1, kind: input, shape index: {}]
  %s2 = inlined_call_operand.vmem [shape: f32[1,128], index: 2, kind: input, shape index: {}]
  %s3 = inlined_call_operand.vmem [shape: f32[1,128], index: 3, kind: input, shape index: {}]
  %s4 = inlined_call_operand.vmem [shape: f32[1,128], index: 4, kind: input, shape index: {}]
  %s5 = inlined_call_operand.hbm [shape: bf16[128,128], index: 5, kind: input, shape index: {}]
  %s6 = inlined_call_operand.vmem [shape: f32[1,128], index: 6, kind: input, shape index: {}]
  %s7 = inlined_call_operand.hbm [shape: f32[16,128], index: 7, kind: output, shape index: {}]
  %s8 = sld [smem:[#allocation0]]
  $region73: #{tpu_custom_call.1} parent=0
    _
  %s10 = ssub.s32 1, %s8
  %s11 = scalar_select 0, %s10, %s8
  $region1: #{tpu_custom_call.1} parent=0
    #allocation2 [shape = 'u8[8192]{0}', space=vmem, size = 0x2000, scoped, tag = 'input window, operand 0']
    #allocation3 [shape = 's32[2]{0}', space=sflag, size = 0x8, scoped, tag = 'scoped memory for tpu_custom_call.1']
    #allocation4 [shape = 's32[2]{0}', space=sflag, size = 0x8, scoped, tag = 'scoped memory for tpu_custom_call.1']
    #allocation5 [shape = 'u8[32768]{0}', space=vmem, size = 0x8000, scoped, tag = 'input window, operand 1, single buffered']
    #allocation6 [shape = 's32[1]{0}', space=sflag, size = 0x4, scoped, tag = 'scoped memory for tpu_custom_call.1']
    #allocation7 [shape = 'u8[32768]{0}', space=vmem, size = 0x8000, scoped, tag = 'input window, operand 5, single buffered']
    #allocation8 [shape = 'u8[8192]{0}', space=vmem, size = 0x2000, scoped, tag = 'output window, operand 0']
    %12 = vsyncpa [#allocation3], 0
    %s13 = scalar_lea.sflag [#allocation3], 1
    %14 = vsyncpa %s13, 0
    %15 = vsyncpa [#allocation6], 0
    %16 = vsyncpa [#allocation4], 0
    %s17 = scalar_lea.sflag [#allocation4], 1
    %18 = vsyncpa %s17, 0
    loop: start=0, step=1, limit=4
    $region2: #{tpu_custom_call.1} parent=1 // loop_pre_header
      _
    $region3: #{tpu_custom_call.1} parent=1 // loop_header
      %s20 = sphi 0, %s24
      %p21 = scmp.ge.s32.totalorder %s20, 4
      %s30 = sphi 0, %s32
      %s33 = sphi 0, %s30
      %s34 = sphi 0, %s33
      %s50 = sphi 0, %s34
      %s54 = sphi 0, %s54
      %s56 = sphi 0, %s54
      %s57 = sphi 0, %s56
      %s71 = sphi 0, %s57
      %s75 = sphi 0, %s75
      %s77 = sphi 0, %s75
      %s78 = sphi 0, %s77
      %s92 = sphi 0, %s78
      %s96 = sphi 0, %s96
      %s98 = sphi 0, %s96
      %s99 = sphi 0, %s98
      %s113 = sphi 0, %s99
      %s117 = sphi 0, %s117
      %s119 = sphi 0, %s117
      %s120 = sphi 0, %s119
      %s134 = sphi 0, %s120
      %s138 = sphi 0, %s138
      %s140 = sphi 0, %s138
      %s141 = sphi 0, %s140
      %s155 = sphi 0, %s141
      %s159 = sphi 0, %s159
      %s161 = sphi 0, %s159
      %s162 = sphi 0, %s161
      %s176 = sphi 0, %s162
      %s182 = sphi 0, %s184
      %s185 = sphi 0, %s182
      %s186 = sphi 0, %s185
      %s202 = sphi 0, %s186
    $region4: #{tpu_custom_call.1} parent=1 // loop_header_branch
      %23 = sbr.rel (%p21) target = $region8
    $region5: #{tpu_custom_call.1} parent=1 // loop_body
      %s25 = ssub.s32 %s20, 1
      %s26 = ssub.s32 %s20, 2
      %s27 = sadd.s32 %s20, 1
      %s28 = ssub.s32 %s20, %s27
      %p29 = scmp.eq.s32.totalorder %s28, 0
      %s31 = sadd.s32 %s30, 1
      %s32 = scalar_select %p29, %s30, %s31
      %p35 = pneg %p29
      %p36 = scmp.eq.s32.totalorder %s20, 1
      %p37 = por %p35, %p36
      %p38 = scmp.ne.s32.totalorder %s30, %s33
      %p39 = scmp.eq.s32.totalorder %s20, 0
      %p40 = por %p38, %p39
      %p41 = scmp.ne.s32.totalorder %s30, %s33
      %p42 = scmp.eq.s32.totalorder %s25, 1
      %p43 = por %p41, %p42
      %p44 = scmp.ne.s32.totalorder %s33, %s34
      %p45 = scmp.eq.s32.totalorder %s25, 0
      %p46 = por %p44, %p45
      %p47 = scmp.ne.s32.totalorder %s33, %s34
      %p48 = scmp.eq.s32.totalorder %s26, 1
      %p49 = por %p47, %p48
      %p51 = scmp.ne.s32.totalorder %s34, %s50
      %p52 = scmp.eq.s32.totalorder %s26, 0
      %p53 = por %p51, %p52
      %s55 = sadd.s32 %s54, 1
      %p58 = scmp.eq.s32.totalorder %s20, 1
      %p59 = scmp.ne.s32.totalorder %s54, %s56
      %p60 = scmp.eq.s32.totalorder %s20, 0
      %p61 = por %p59, %p60
      %p62 = scmp.ne.s32.totalorder %s54, %s56
      %p63 = scmp.eq.s32.totalorder %s25, 1
      %p64 = por %p62, %p63
      %p65 = scmp.ne.s32.totalorder %s56, %s57
      %p66 = scmp.eq.s32.totalorder %s25, 0
      %p67 = por %p65, %p66
      %p68 = scmp.ne.s32.totalorder %s56, %s57
      %p69 = scmp.eq.s32.totalorder %s26, 1
      %p70 = por %p68, %p69
      %p72 = scmp.ne.s32.totalorder %s57, %s71
      %p73 = scmp.eq.s32.totalorder %s26, 0
      %p74 = por %p72, %p73
      %s76 = sadd.s32 %s75, 1
      %p79 = scmp.eq.s32.totalorder %s20, 1
      %p80 = scmp.ne.s32.totalorder %s75, %s77
      %p81 = scmp.eq.s32.totalorder %s20, 0
      %p82 = por %p80, %p81
      %p83 = scmp.ne.s32.totalorder %s75, %s77
      %p84 = scmp.eq.s32.totalorder %s25, 1
      %p85 = por %p83, %p84
      %p86 = scmp.ne.s32.totalorder %s77, %s78
      %p87 = scmp.eq.s32.totalorder %s25, 0
      %p88 = por %p86, %p87
      %p89 = scmp.ne.s32.totalorder %s77, %s78
      %p90 = scmp.eq.s32.totalorder %s26, 1
      %p91 = por %p89, %p90
      %p93 = scmp.ne.s32.totalorder %s78, %s92
      %p94 = scmp.eq.s32.totalorder %s26, 0
      %p95 = por %p93, %p94
      %s97 = sadd.s32 %s96, 1
      %p100 = scmp.eq.s32.totalorder %s20, 1
      %p101 = scmp.ne.s32.totalorder %s96, %s98
      %p102 = scmp.eq.s32.totalorder %s20, 0
      %p103 = por %p101, %p102
      %p104 = scmp.ne.s32.totalorder %s96, %s98
      %p105 = scmp.eq.s32.totalorder %s25, 1
      %p106 = por %p104, %p105
      %p107 = scmp.ne.s32.totalorder %s98, %s99
      %p108 = scmp.eq.s32.totalorder %s25, 0
      %p109 = por %p107, %p108
      %p110 = scmp.ne.s32.totalorder %s98, %s99
      %p111 = scmp.eq.s32.totalorder %s26, 1
      %p112 = por %p110, %p111
      %p114 = scmp.ne.s32.totalorder %s99, %s113
      %p115 = scmp.eq.s32.totalorder %s26, 0
      %p116 = por %p114, %p115
      %s118 = sadd.s32 %s117, 1
      %p121 = scmp.eq.s32.totalorder %s20, 1
      %p122 = scmp.ne.s32.totalorder %s117, %s119
      %p123 = scmp.eq.s32.totalorder %s20, 0
      %p124 = por %p122, %p123
      %p125 = scmp.ne.s32.totalorder %s117, %s119
      %p126 = scmp.eq.s32.totalorder %s25, 1
      %p127 = por %p125, %p126
      %p128 = scmp.ne.s32.totalorder %s119, %s120
      %p129 = scmp.eq.s32.totalorder %s25, 0
      %p130 = por %p128, %p129
      %p131 = scmp.ne.s32.totalorder %s119, %s120
      %p132 = scmp.eq.s32.totalorder %s26, 1
      %p133 = por %p131, %p132
      %p135 = scmp.ne.s32.totalorder %s120, %s134
      %p136 = scmp.eq.s32.totalorder %s26, 0
      %p137 = por %p135, %p136
      %s139 = sadd.s32 %s138, 1
      %p142 = scmp.eq.s32.totalorder %s20, 1
      %p143 = scmp.ne.s32.totalorder %s138, %s140
      %p144 = scmp.eq.s32.totalorder %s20, 0
      %p145 = por %p143, %p144
      %p146 = scmp.ne.s32.totalorder %s138, %s140
      %p147 = scmp.eq.s32.totalorder %s25, 1
      %p148 = por %p146, %p147
      %p149 = scmp.ne.s32.totalorder %s140, %s141
      %p150 = scmp.eq.s32.totalorder %s25, 0
      %p151 = por %p149, %p150
      %p152 = scmp.ne.s32.totalorder %s140, %s141
      %p153 = scmp.eq.s32.totalorder %s26, 1
      %p154 = por %p152, %p153
      %p156 = scmp.ne.s32.totalorder %s141, %s155
      %p157 = scmp.eq.s32.totalorder %s26, 0
      %p158 = por %p156, %p157
      %s160 = sadd.s32 %s159, 1
      %p163 = scmp.eq.s32.totalorder %s20, 1
      %p164 = scmp.ne.s32.totalorder %s159, %s161
      %p165 = scmp.eq.s32.totalorder %s20, 0
      %p166 = por %p164, %p165
      %p167 = scmp.ne.s32.totalorder %s159, %s161
      %p168 = scmp.eq.s32.totalorder %s25, 1
      %p169 = por %p167, %p168
      %p170 = scmp.ne.s32.totalorder %s161, %s162
      %p171 = scmp.eq.s32.totalorder %s25, 0
      %p172 = por %p170, %p171
      %p173 = scmp.ne.s32.totalorder %s161, %s162
      %p174 = scmp.eq.s32.totalorder %s26, 1
      %p175 = por %p173, %p174
      %p177 = scmp.ne.s32.totalorder %s162, %s176
      %p178 = scmp.eq.s32.totalorder %s26, 0
      %p179 = por %p177, %p178
      %s180 = ssub.s32 %s20, %s27
      %p181 = scmp.eq.s32.totalorder %s180, 0
      %s183 = sadd.s32 %s182, 1
      %s184 = scalar_select %p181, %s182, %s183
      %p187 = pneg %p181
      %p188 = scmp.eq.s32.totalorder %s20, 1
      %p189 = por %p187, %p188
      %p190 = scmp.ne.s32.totalorder %s182, %s185
      %p191 = scmp.eq.s32.totalorder %s20, 0
      %p192 = por %p190, %p191
      %p193 = scmp.ne.s32.totalorder %s182, %s185
      %p194 = scmp.eq.s32.totalorder %s25, 1
      %p195 = por %p193, %p194
      %p196 = scmp.ne.s32.totalorder %s185, %s186
      %p197 = scmp.eq.s32.totalorder %s25, 0
      %p198 = por %p196, %p197
      %p199 = scmp.ne.s32.totalorder %s185, %s186
      %p200 = scmp.eq.s32.totalorder %s26, 1
      %p201 = por %p199, %p200
      %p203 = scmp.ne.s32.totalorder %s186, %s202
      %p204 = scmp.eq.s32.totalorder %s26, 0
      %p205 = por %p203, %p204
      %p206 = scmp.le.s32.totalorder 1, %s20
      %p207 = scmp.lt.s32.totalorder %s20, 3
      %p208 = pnand %p206, %p207
      %p209 = pneg %p208
      // Predicated region
      $region9: #{tpu_custom_call.1} parent=5 // pred_check
        _
      $region10: #{tpu_custom_call.1} parent=5 // pred_check_branch
        %211 = sbr.rel (%p208) target = $region12
      $region11: #{tpu_custom_call.1} parent=5 // pred_region
        %s212 = ssub.s32 %s20, 1
        // Predicated region
        $region13: #{tpu_custom_call.1} parent=11 // pred_check
          %p213 = pneg %p67
        $region14: #{tpu_custom_call.1} parent=11 // pred_check_branch
          %215 = sbr.rel (%p213) target = $region16
        $region15: #{tpu_custom_call.1} parent=11 // pred_region
          %217 = vsyncadd [#allocation6], 0
          %s218 = sshll.u32 %s1, 4
          %s219 = int_to_ptr.hbm [resolvable:$true] %s218
          %s220 = sshll.u32 [#allocation5], 4
          %s221 = int_to_ptr.vmem [resolvable:$true] %s220
          %226 = dma.hbm_to_vmem [thread:$0]  %s219, 1024, %s221, [#allocation6], 64, 64, 4
        $region16: #{tpu_custom_call.1} parent=11 // pred_fallthru
          _
        // Predicated region
        $region17: #{tpu_custom_call.1} parent=11 // pred_check
          %p227 = pneg %p88
        $region18: #{tpu_custom_call.1} parent=11 // pred_check_branch
          %229 = sbr.rel (%p227) target = $region20
        $region19: #{tpu_custom_call.1} parent=11 // pred_region
          _
        $region20: #{tpu_custom_call.1} parent=11 // pred_fallthru
          _
        // Predicated region
        $region21: #{tpu_custom_call.1} parent=11 // pred_check
          %p230 = pneg %p109
        $region22: #{tpu_custom_call.1} parent=11 // pred_check_branch
          %232 = sbr.rel (%p230) target = $region24
        $region23: #{tpu_custom_call.1} parent=11 // pred_region
          _
        $region24: #{tpu_custom_call.1} parent=11 // pred_fallthru
          _
        // Predicated region
        $region25: #{tpu_custom_call.1} parent=11 // pred_check
          %p233 = pneg %p130
        $region26: #{tpu_custom_call.1} parent=11 // pred_check_branch
          %235 = sbr.rel (%p233) target = $region28
        $region27: #{tpu_custom_call.1} parent=11 // pred_region
          _
        $region28: #{tpu_custom_call.1} parent=11 // pred_fallthru
          _
        // Predicated region
        $region29: #{tpu_custom_call.1} parent=11 // pred_check
          %p236 = pneg %p151
        $region30: #{tpu_custom_call.1} parent=11 // pred_check_branch
          %238 = sbr.rel (%p236) target = $region32
        $region31: #{tpu_custom_call.1} parent=11 // pred_region
          %240 = vsyncadd [#allocation6], 0
          %s241 = sshll.u32 %s5, 4
          %s242 = int_to_ptr.hbm [resolvable:$true] %s241
          %s243 = sshll.u32 [#allocation7], 4
          %s244 = int_to_ptr.vmem [resolvable:$true] %s243
          %249 = dma.hbm_to_vmem [thread:$0]  %s242, 1024, %s244, [#allocation6], 64, 64, 4
        $region32: #{tpu_custom_call.1} parent=11 // pred_fallthru
          _
        // Predicated region
        $region33: #{tpu_custom_call.1} parent=11 // pred_check
          %p250 = pneg %p172
        $region34: #{tpu_custom_call.1} parent=11 // pred_check_branch
          %252 = sbr.rel (%p250) target = $region36
        $region35: #{tpu_custom_call.1} parent=11 // pred_region
          _
        $region36: #{tpu_custom_call.1} parent=11 // pred_fallthru
          _
      $region12: #{tpu_custom_call.1} parent=5 // pred_fallthru
        _
      %p253 = scmp.lt.s32.totalorder %s20, 2
      // Predicated region
      $region37: #{tpu_custom_call.1} parent=5 // pred_check
        %p254 = pneg %p253
      $region38: #{tpu_custom_call.1} parent=5 // pred_check_branch
        %256 = sbr.rel (%p254) target = $region40
      $region39: #{tpu_custom_call.1} parent=5 // pred_region
        // Predicated region
        $region41: #{tpu_custom_call.1} parent=39 // pred_check
          %p257 = pneg %p40
        $region42: #{tpu_custom_call.1} parent=39 // pred_check_branch
          %259 = sbr.rel (%p257) target = $region44
        $region43: #{tpu_custom_call.1} parent=39 // pred_region
          %s260 = sand.u32 %s30, 1
          %s261 = scalar_lea.sflag [#allocation3], %s260
          %s262 = sand.u32 %s30, 1
          %s263 = smul.addr %s262, 8
          %s264 = scalar_lea.vmem [#allocation2], %s263
          %266 = vsyncadd %s261, 0
          %s267 = smul.addr %s20, 8
          %s268 = scalar_lea.hbm %s0, %s267
          %s270 = sshll.u32 %s268, 4
          %s271 = int_to_ptr.hbm [resolvable:$true] %s270
          %s272 = sshll.u32 %s264, 4
          %s273 = int_to_ptr.vmem [resolvable:$true] %s272
          %275 = dma.hbm_to_vmem [thread:$0]  %s271, 128, %s273, %s261
        $region44: #{tpu_custom_call.1} parent=39 // pred_fallthru
          _
      $region40: #{tpu_custom_call.1} parent=5 // pred_fallthru
        _
      %p276 = scmp.le.s32.totalorder 1, %s20
      %p277 = scmp.lt.s32.totalorder %s20, 3
      %p278 = pnand %p276, %p277
      %p279 = pneg %p278
      // Predicated region
      $region45: #{tpu_custom_call.1} parent=5 // pred_check
        _
      $region46: #{tpu_custom_call.1} parent=5 // pred_check_branch
        %281 = sbr.rel (%p278) target = $region48
      $region47: #{tpu_custom_call.1} parent=5 // pred_region
        %s282 = ssub.s32 %s20, 1
        %s283 = sand.u32 %s33, 1
        %s284 = scalar_lea.sflag [#allocation3], %s283
        %s285 = sand.u32 %s33, 1
        %s286 = smul.addr %s285, 8
        %s287 = scalar_lea.vmem [#allocation2], %s286
        // Predicated region
        $region49: #{tpu_custom_call.1} parent=47 // pred_check
          %p288 = pneg %p46
        $region50: #{tpu_custom_call.1} parent=47 // pred_check_branch
          %290 = sbr.rel (%p288) target = $region52
        $region51: #{tpu_custom_call.1} parent=47 // pred_region
          %292 = dma.done %s284, 128
        $region52: #{tpu_custom_call.1} parent=47 // pred_fallthru
          _
        // Predicated region
        $region53: #{tpu_custom_call.1} parent=47 // pred_check
          %p293 = pneg %p67
        $region54: #{tpu_custom_call.1} parent=47 // pred_check_branch
          %295 = sbr.rel (%p293) target = $region56
        $region55: #{tpu_custom_call.1} parent=47 // pred_region
          %297 = dma.done [#allocation6], 1024
        $region56: #{tpu_custom_call.1} parent=47 // pred_fallthru
          _
        // Predicated region
        $region57: #{tpu_custom_call.1} parent=47 // pred_check
          %p298 = pneg %p151
        $region58: #{tpu_custom_call.1} parent=47 // pred_check_branch
          %300 = sbr.rel (%p298) target = $region60
        $region59: #{tpu_custom_call.1} parent=47 // pred_region
          %302 = dma.done [#allocation6], 1024
        $region60: #{tpu_custom_call.1} parent=47 // pred_fallthru
          _
        %s303 = sand.u32 %s33, 1
        %s304 = scalar_lea.sflag [#allocation3], %s303
        %s305 = sand.u32 %s33, 1
        %s306 = smul.addr %s305, 8
        %s307 = scalar_lea.vmem [#allocation2], %s306
        %p308 = pneg %p46
        %p309 = pneg %p43
        %p310 = pneg %p67
        %p311 = pneg %p64
        %p312 = pneg %p88
        %p313 = pneg %p85
        %p314 = pneg %p109
        %p315 = pneg %p106
        %p316 = pneg %p130
        %p317 = pneg %p127
        %p318 = pneg %p151
        %p319 = pneg %p148
        %p320 = pneg %p172
        %p321 = pneg %p169
        %p322 = pneg %p198
        %p323 = pneg %p195
        %s324 = sand.u32 %s185, 1
        %s325 = scalar_lea.sflag [#allocation4], %s324
        %s326 = sand.u32 %s185, 1
        %s327 = smul.addr %s326, 8
        %s328 = scalar_lea.vmem [#allocation8], %s327
        %v329 = vld [vmem:[%s287] sm:$0xff]
        %v330 = vpack.c.bf16 %v329, %v329
        %v331 = vld [vmem:[#allocation5] sm:$0xf]
        %v332 = vld [vmem:[#allocation5 + $0x4] sm:$0xf]
        %v333 = vld [vmem:[#allocation5 + $0x8] sm:$0xf]
        %v334 = vld [vmem:[#allocation5 + $0xc] sm:$0xf]
        %v335 = vld [vmem:[#allocation5 + $0x10] sm:$0xf]
        %v336 = vld [vmem:[#allocation5 + $0x14] sm:$0xf]
        %v337 = vld [vmem:[#allocation5 + $0x18] sm:$0xf]
        %v338 = vld [vmem:[#allocation5 + $0x1c] sm:$0xf]
        %v339 = vld [vmem:[#allocation5 + $0x20] sm:$0xf]
        %v340 = vld [vmem:[#allocation5 + $0x24] sm:$0xf]
        %v341 = vld [vmem:[#allocation5 + $0x28] sm:$0xf]
        %v342 = vld [vmem:[#allocation5 + $0x2c] sm:$0xf]
        %v343 = vld [vmem:[#allocation5 + $0x30] sm:$0xf]
        %v344 = vld [vmem:[#allocation5 + $0x34] sm:$0xf]
        %v345 = vld [vmem:[#allocation5 + $0x38] sm:$0xf]
        %v346 = vld [vmem:[#allocation5 + $0x3c] sm:$0xf]
        %v347 = vld [vmem:[%s2] sm:$0x1]
        %v349 = vperm.slane %v347, 0
        %v367 = vunpack.c.l.b16 %v331
        %v368 = vunpack.c.l.b16 %v332
        %v369 = vunpack.c.l.b16 %v333
        %v370 = vunpack.c.l.b16 %v334
        %v371 = vunpack.c.l.b16 %v335
        %v372 = vunpack.c.l.b16 %v336
        %v373 = vunpack.c.l.b16 %v337
        %v374 = vunpack.c.l.b16 %v338
        %v375 = vunpack.c.l.b16 %v339
        %v376 = vunpack.c.l.b16 %v340
        %v377 = vunpack.c.l.b16 %v341
        %v378 = vunpack.c.l.b16 %v342
        %v379 = vunpack.c.l.b16 %v343
        %v380 = vunpack.c.l.b16 %v344
        %v381 = vunpack.c.l.b16 %v345
        %v382 = vunpack.c.l.b16 %v346
        %v383 = vpack.c.b16 %v368, %v367
        %v384 = vpack.c.b16 %v370, %v369
        %v385 = vpack.c.b16 %v372, %v371
        %v386 = vpack.c.b16 %v374, %v373
        %v387 = vpack.c.b16 %v376, %v375
        %v388 = vpack.c.b16 %v378, %v377
        %v389 = vpack.c.b16 %v380, %v379
        %v390 = vpack.c.b16 %v382, %v381
        %399 = vmatpush.bf16.msra.mxu0 %v390
        %400 = vmatpush.bf16.msra.mxu0 %v389
        %401 = vmatpush.bf16.msra.mxu0 %v388
        %402 = vmatpush.bf16.msra.mxu0 %v387
        %403 = vmatpush.bf16.msra.mxu0 %v386
        %404 = vmatpush.bf16.msra.mxu0 %v385
        %405 = vmatpush.bf16.msra.mxu0 %v384
        %406 = vmatpush.bf16.msra.mxu0 %v383
        %407 = vmatmul.bf16.gmra.mxu0 %v330
        %v408 = vpop.f32.mrf.mxu0
        %v409 = vadd.f32 %v349, %v408
        %v410 = vpop.f32.mrf.mxu0
        %411 = vdwg.mxu0
        %412 = vadd.xlane.f32.xlu0 %v409
        %v413 = vpop.xlane.xlu0 %412
        %v414 = vmul.f32 %v413, 0.03125
        %v415 = vmul.f32 %v409, %v409
        %416 = vadd.xlane.f32.xlu0 %v415
        %v417 = vpop.xlane.xlu0 %416
        %v418 = vmul.f32 %v417, 0.03125
        %v419 = vmul.f32 %v414, %v414
        %v420 = vsub.f32 %v418, %v419
        %v421 = vmax.f32 %v420, 0.0
        %v422 = vsub.f32 %v409, %v414
        %v423 = vadd.f32 %v421, 1e-05
        %v424 = vrsqrt.pop %v423
        %v425 = vmul.f32 %v424, %v423
        %v426 = vmul.f32 %v425, %v424
        %v427 = vmul.f32 0.5, %v426
        %v428 = vsub.f32 1.5, %v427
        %v429 = vmul.f32 %v424, %v428
        %vm430 = vweird.f32 %v423
        %vm431 = vweird.f32 %v424
        %vm432 = vmor %vm430, %vm431
        %v433 = vsel %vm432, %v424, %v429
        %v434 = vmul.f32 %v422, %v433
        %v435 = vld [vmem:[%s3] sm:$0x1]
        %v437 = vperm.slane %v435, 0
        %v439 = vmul.f32 %v434, %v437
        %v440 = vld [vmem:[%s4] sm:$0x1]
        %v442 = vperm.slane %v440, 0
        %v444 = vadd.f32 %v439, %v442
        %v445 = vmax.f32 %v444, 0.0
        %v446 = vpack.c.bf16 %v445, %v445
        %v447 = vld [vmem:[#allocation7] sm:$0xf]
        %v448 = vld [vmem:[#allocation7 + $0x4] sm:$0xf]
        %v449 = vld [vmem:[#allocation7 + $0x8] sm:$0xf]
        %v450 = vld [vmem:[#allocation7 + $0xc] sm:$0xf]
        %v451 = vld [vmem:[#allocation7 + $0x10] sm:$0xf]
        %v452 = vld [vmem:[#allocation7 + $0x14] sm:$0xf]
        %v453 = vld [vmem:[#allocation7 + $0x18] sm:$0xf]
        %v454 = vld [vmem:[#allocation7 + $0x1c] sm:$0xf]
        %v455 = vld [vmem:[#allocation7 + $0x20] sm:$0xf]
        %v456 = vld [vmem:[#allocation7 + $0x24] sm:$0xf]
        %v457 = vld [vmem:[#allocation7 + $0x28] sm:$0xf]
        %v458 = vld [vmem:[#allocation7 + $0x2c] sm:$0xf]
        %v459 = vld [vmem:[#allocation7 + $0x30] sm:$0xf]
        %v460 = vld [vmem:[#allocation7 + $0x34] sm:$0xf]
        %v461 = vld [vmem:[#allocation7 + $0x38] sm:$0xf]
        %v462 = vld [vmem:[#allocation7 + $0x3c] sm:$0xf]
        %v463 = vld [vmem:[%s6] sm:$0x1]
        %v465 = vperm.slane %v463, 0
        %v483 = vunpack.c.l.b16 %v447
        %v484 = vunpack.c.l.b16 %v448
        %v485 = vunpack.c.l.b16 %v449
        %v486 = vunpack.c.l.b16 %v450
        %v487 = vunpack.c.l.b16 %v451
        %v488 = vunpack.c.l.b16 %v452
        %v489 = vunpack.c.l.b16 %v453
        %v490 = vunpack.c.l.b16 %v454
        %v491 = vunpack.c.l.b16 %v455
        %v492 = vunpack.c.l.b16 %v456
        %v493 = vunpack.c.l.b16 %v457
        %v494 = vunpack.c.l.b16 %v458
        %v495 = vunpack.c.l.b16 %v459
        %v496 = vunpack.c.l.b16 %v460
        %v497 = vunpack.c.l.b16 %v461
        %v498 = vunpack.c.l.b16 %v462
        %v499 = vpack.c.b16 %v484, %v483
        %v500 = vpack.c.b16 %v486, %v485
        %v501 = vpack.c.b16 %v488, %v487
        %v502 = vpack.c.b16 %v490, %v489
        %v503 = vpack.c.b16 %v492, %v491
        %v504 = vpack.c.b16 %v494, %v493
        %v505 = vpack.c.b16 %v496, %v495
        %v506 = vpack.c.b16 %v498, %v497
        %515 = vmatpush.bf16.msra.mxu0 %v506
        %516 = vmatpush.bf16.msra.mxu0 %v505
        %517 = vmatpush.bf16.msra.mxu0 %v504
        %518 = vmatpush.bf16.msra.mxu0 %v503
        %519 = vmatpush.bf16.msra.mxu0 %v502
        %520 = vmatpush.bf16.msra.mxu0 %v501
        %521 = vmatpush.bf16.msra.mxu0 %v500
        %522 = vmatpush.bf16.msra.mxu0 %v499
        %523 = vmatmul.bf16.gmra.mxu0 %v446
        %v524 = vpop.f32.mrf.mxu0
        %v525 = vadd.f32 %v465, %v524
        %v526 = vpop.f32.mrf.mxu0
        %527 = vdwg.mxu0
        %v528 = vmul.f32 %v525, 0.5
        %v529 = vtanh.pop %v528
        %v530 = vadd.f32 %v529, 1.0
        %v531 = vmul.f32 %v530, 0.5
        %532 = vst [vmem:[%s328] sm:$0xff] %v531
        %s533 = sand.u32 %s185, 1
        %s534 = scalar_lea.sflag [#allocation4], %s533
        %s535 = sand.u32 %s185, 1
        %s536 = smul.addr %s535, 8
        %s537 = scalar_lea.vmem [#allocation8], %s536
        // Predicated region
        $region61: #{tpu_custom_call.1} parent=47 // pred_check
          %p538 = pneg %p195
        $region62: #{tpu_custom_call.1} parent=47 // pred_check_branch
          %540 = sbr.rel (%p538) target = $region64
        $region63: #{tpu_custom_call.1} parent=47 // pred_region
          %542 = vsyncadd %s534, 0
          %s543 = smul.addr %s25, 8
          %s544 = scalar_lea.hbm %s7, %s543
          %s546 = sshll.u32 %s537, 4
          %s547 = int_to_ptr.vmem [resolvable:$true] %s546
          %s548 = sshll.u32 %s544, 4
          %s549 = int_to_ptr.hbm [resolvable:$true] %s548
          %551 = dma.vmem_to_hbm [thread:$0]  %s547, 128, %s549, %s534
        $region64: #{tpu_custom_call.1} parent=47 // pred_fallthru
          _
      $region48: #{tpu_custom_call.1} parent=5 // pred_fallthru
        _
      %p552 = scmp.le.s32.totalorder 2, %s20
      // Predicated region
      $region65: #{tpu_custom_call.1} parent=5 // pred_check
        %p553 = pneg %p552
      $region66: #{tpu_custom_call.1} parent=5 // pred_check_branch
        %555 = sbr.rel (%p553) target = $region68
      $region67: #{tpu_custom_call.1} parent=5 // pred_region
        %s556 = ssub.s32 %s20, 2
        // Predicated region
        $region69: #{tpu_custom_call.1} parent=67 // pred_check
          %p557 = pneg %p201
        $region70: #{tpu_custom_call.1} parent=67 // pred_check_branch
          %559 = sbr.rel (%p557) target = $region72
        $region71: #{tpu_custom_call.1} parent=67 // pred_region
          %s560 = sand.u32 %s186, 1
          %s561 = scalar_lea.sflag [#allocation4], %s560
          %s562 = sand.u32 %s186, 1
          %s563 = smul.addr %s562, 8
          %s564 = scalar_lea.vmem [#allocation8], %s563
          %566 = dma.done %s561, 128
        $region72: #{tpu_custom_call.1} parent=67 // pred_fallthru
          _
      $region68: #{tpu_custom_call.1} parent=5 // pred_fallthru
        _
    $region6: #{tpu_custom_call.1} parent=1 // loop_footer
      %s24 = sadd.s32 1, %s20
    $region7: #{tpu_custom_call.1} parent=1 // loop_footer_branch
      %19 = sbr.rel target = $region3
    $region8: #{tpu_custom_call.1} parent=1 // loop_exit
      _
    %567 = vsyncpa [#allocation3], 1
    %s568 = scalar_lea.sflag [#allocation3], 1
    %569 = vsyncpa %s568, 1
    %570 = vsyncpa [#allocation6], 1
    %571 = vsyncpa [#allocation4], 1
    %s572 = scalar_lea.sflag [#allocation4], 1
    %573 = vsyncpa %s572, 1

</llo_original>
